<compile_context>
chip_gen: v5e
topology: v5e:2x2
jax: 0.10.0
libtpu: 0.0.40
codegen_flags: <defaults>
</compile_context>

<pallas_src>
import jax
import jax.numpy as jnp
from jax.experimental import pallas as pl
from jax.experimental.pallas import tpu as pltpu

IN_FEATURES = 2048
OUT_FEATURES = 4

_MiB = 1024 * 1024


def _cdiv(a, b):
    return (a + b - 1) // b


def _round_up(x, m):
    return ((x + m - 1) // m) * m


def _vmem_capacity_bytes():
    """Trace-time VMEM capacity query; conservative (v7x) fallback."""
    try:
        info = pltpu.get_tpu_info()
        cap = getattr(info, "vmem_capacity_bytes", None)
        if cap:
            return int(cap)
    except Exception:
        pass
    return 64 * _MiB


def _tile_plan(M, itemsize, max_tm_override=None):
    """Pick M-tile, x pipeline depth and VMEM limit for this TPU generation."""
    # Sublane-packing-aware rounding: 8 rows (f32), 16 (bf16), 32 (int8).
    mult = max(8, 32 // int(itemsize))

    vmem_cap = _vmem_capacity_bytes()
    small_vmem = vmem_cap < 100 * _MiB  # v7x-like: 64 MiB per TensorCore
    # v7x: leave headroom below the 64 MiB physical VMEM; v5e/v6e: 128 MiB phys.
    vmem_limit = (48 if small_vmem else 64) * _MiB

    max_tm = 2048 if max_tm_override is None else int(max_tm_override)

    # v7x has 2 TensorCores sharded over the "parallel" grid axis: make sure a
    # medium-sized M is split into >= 2 balanced blocks so both cores stream x.
    min_blocks = 2 if (small_vmem and M >= 1024) else 1

    if M <= max_tm and min_blocks == 1:
        # Single block covering all rows: block dim == full array dim, which is
        # a legal block shape regardless of divisibility, and needs no padding.
        tm = M
    else:
        n_blocks = max(min_blocks, _cdiv(M, max_tm))
        tm = min(max_tm, _round_up(_cdiv(M, n_blocks), mult))

    n_steps = _cdiv(M, tm)
    buf_bytes = tm * IN_FEATURES * int(itemsize)
    # Deepen the x pipeline only when three buffers fit comfortably in VMEM.
    x_buffers = 3 if (n_steps >= 3 and buf_bytes <= 8 * _MiB) else 2
    return tm, x_buffers, vmem_limit


def _linear_kernel(x_ref, w_ref, o_ref):
    # One full-K MXU matmul per M-tile; accumulate in f32, cast to output dtype.
    o_ref[...] = jnp.dot(
        x_ref[...], w_ref[...], preferred_element_type=jnp.float32
    ).astype(o_ref.dtype)


def predictor_yololike_forward(x, w_t, *, max_tm=None):
    """x: (..., 2048), w_t: (2048, 4) -> (..., 4). Equivalent to x @ w_t."""
    orig_shape = x.shape
    assert orig_shape[-1] == IN_FEATURES
    x2d = x.reshape(-1, IN_FEATURES)
    M, K = x2d.shape
    N = w_t.shape[1]

    tm, x_buffers, vmem_limit = _tile_plan(M, x2d.dtype.itemsize, max_tm)
    grid = (_cdiv(M, tm),)

    cost = pl.CostEstimate(
        flops=2 * M * K * N,
        bytes_accessed=M * K * x2d.dtype.itemsize
        + K * N * w_t.dtype.itemsize
        + M * N * x2d.dtype.itemsize,
        transcendentals=0,
    )

    out = pl.pallas_call(
        _linear_kernel,
        out_shape=jax.ShapeDtypeStruct((M, N), x.dtype),
        grid_spec=pltpu.PrefetchScalarGridSpec(
            num_scalar_prefetch=0,
            grid=grid,
            in_specs=[
                # Stream x in (tm, 2048) tiles over M; edge block is partial
                # (masked on the output side), so no wrapper padding is needed.
                pl.BlockSpec((tm, K), lambda i: (i, 0),
                             pipeline_mode=pl.Buffered(x_buffers)),
                # Whole weight stays resident (same block every grid step);
                # single-buffered since it is never re-fetched.
                pl.BlockSpec((K, N), lambda i: (0, 0),
                             pipeline_mode=pl.Buffered(1)),
            ],
            # Output last dim equals the full array dim (4) -> legal block.
            out_specs=pl.BlockSpec((tm, N), lambda i: (i, 0)),
        ),
        compiler_params=pltpu.CompilerParams(
            dimension_semantics=("parallel",),
            vmem_limit_bytes=vmem_limit,
        ),
        cost_estimate=cost,
    )(x2d, w_t)

    return out.reshape(*orig_shape[:-1], N)


def init_params(key):
    """Deterministic synthetic weight matching nn.Linear(2048, 4, bias=False).

    Mimics the 1/sqrt(fan_in) uniform bound of PyTorch's default init (exact
    values don't matter for the kernel test).
    """
    bound = 1.0 / jnp.sqrt(jnp.float32(IN_FEATURES))
    w = jax.random.uniform(
        key, (OUT_FEATURES, IN_FEATURES), jnp.float32, minval=-bound, maxval=bound
    )
    return w.T  # store transposed: (2048, 4)


if __name__ == "__main__":
    key = jax.random.PRNGKey(0)
    k_w, k_x = jax.random.split(key)

    w_t = init_params(k_w)

    # Small example input consistent with the module: (batch=2, seq=8, 2048).
    x = jax.random.normal(k_x, (2, 8, IN_FEATURES), jnp.float32)
    out = predictor_yololike_forward(x, w_t)
    out = jax.block_until_ready(out)

    ref = x @ w_t
    assert out.shape == (2, 8, OUT_FEATURES)
    assert jnp.allclose(out, ref, atol=1e-4, rtol=1e-4)

    # Exercise the pad-free partial-edge-block path: M=20 rows with a forced
    # 8-row tile -> grid of 3 steps, last block masked to 4 valid rows.
    x_odd = jax.random.normal(jax.random.PRNGKey(1), (20, IN_FEATURES), jnp.float32)
    out_odd = jax.block_until_ready(
        predictor_yololike_forward(x_odd, w_t, max_tm=8)
    )
    assert out_odd.shape == (20, OUT_FEATURES)
    assert jnp.allclose(out_odd, x_odd @ w_t, atol=1e-4, rtol=1e-4)

    print("KERNEL_OK")
</pallas_src>

<mosaic_0001>
module attributes {stable_mosaic.version = 11 : i64} {
  func.func @_linear_kernel(%arg0: i32, %arg1: memref<16x2048xf32, #tpu.memory_space<vmem>>, %arg2: memref<2048x4xf32, #tpu.memory_space<vmem>>, %arg3: memref<16x4xf32, #tpu.memory_space<vmem>>) attributes {dimension_semantics = [#tpu.dimension_semantics<parallel>], iteration_bounds = array<i64: 1>, scalar_prefetch = 0 : i64, scratch_operands = 0 : i64, tpu.core_type = #tpu.core_type<tc>, window_params = [{pipeline_mode = #tpu.pipeline_mode<double_buffered>, transform_indices = @transform_0, window_bounds = array<i64: 16, 2048>}, {pipeline_mode = #tpu.pipeline_mode<synchronous>, transform_indices = @transform_1, window_bounds = array<i64: 2048, 4>}, {transform_indices = @transform_2, window_bounds = array<i64: 16, 4>}]} {
    %c0 = arith.constant 0 : index
    %c0_0 = arith.constant 0 : index
    %0 = vector.load %arg1[%c0, %c0_0] : memref<16x2048xf32, #tpu.memory_space<vmem>>, vector<16x2048xf32>
    %c0_1 = arith.constant 0 : index
    %c0_2 = arith.constant 0 : index
    %1 = vector.load %arg2[%c0_1, %c0_2] : memref<2048x4xf32, #tpu.memory_space<vmem>>, vector<2048x4xf32>
    %cst = arith.constant dense<0.000000e+00> : vector<16x4xf32>
    %2 = tpu.matmul %0, %1, %cst {dimension_numbers = #tpu.dot_dimension_numbers<[1], [0], [0], [1], [0, 0, 1, 1], [], []>} : vector<16x2048xf32>, vector<2048x4xf32>, vector<16x4xf32> -> vector<16x4xf32>
    %c0_3 = arith.constant 0 : index
    %c0_4 = arith.constant 0 : index
    %3 = vector.load %arg3[%c0_3, %c0_4] : memref<16x4xf32, #tpu.memory_space<vmem>>, vector<16x4xf32>
    tpu.vector_store %arg3[%c0_3, %c0_4], %2 {strides = array<i32>} : memref<16x4xf32, #tpu.memory_space<vmem>>, vector<16x4xf32>,
    return
  }
  func.func @transform_0(%arg0: i32) -> (i32, i32) {
    %c0_i32 = arith.constant 0 : i32
    %c0_i32_0 = arith.constant 0 : i32
    return %arg0, %c0_i32 : i32, i32
  }
  func.func @transform_1(%arg0: i32) -> (i32, i32) {
    %c0_i32 = arith.constant 0 : i32
    %c0_i32_0 = arith.constant 0 : i32
    %c0_i32_1 = arith.constant 0 : i32
    return %c0_i32, %c0_i32_0 : i32, i32
  }
  func.func @transform_2(%arg0: i32) -> (i32, i32) {
    %c0_i32 = arith.constant 0 : i32
    %c0_i32_0 = arith.constant 0 : i32
    return %arg0, %c0_i32 : i32, i32
  }
}

</mosaic_0001>

<llo_original>
// kernel: tpu_custom_call.1
$region0: #{tpu_custom_call.1}
  #allocation0 [shape = 'u32[]', space=smem, size = 0x4, offset = 0x4, fixed_abs, tag = 'smem constant byte address 0x4 - core index']
  #allocation1 [shape = 'u32[72,128]{1,0:T(1,128)}', space=vmem, size = 0x9000, scoped, tag = 'internal scratch']
  %s0 = inlined_call_operand.vmem [shape: f32[16,2048], index: 0, kind: input, shape index: {}]
  %s1 = inlined_call_operand.vmem [shape: f32[2048,4], index: 1, kind: input, shape index: {}]
  %s2 = inlined_call_operand.vmem [shape: f32[16,4], index: 2, kind: output, shape index: {}]
  %s3 = sld [smem:[#allocation0]]
  $region18: #{tpu_custom_call.1} parent=0
    _
  %s5 = ssub.s32 1, %s3
  %s6 = scalar_select 0, %s5, %s3
  // Predicated region
  $region2: #{tpu_custom_call.1} parent=0 // pred_check
    _
  $region3: #{tpu_custom_call.1} parent=0 // pred_check_branch
    %8 = sbr.rel (0) target = $region5
  $region4: #{tpu_custom_call.1} parent=0 // pred_region
    _
  $region5: #{tpu_custom_call.1} parent=0 // pred_fallthru
    _
  // Predicated region
  $region6: #{tpu_custom_call.1} parent=0 // pred_check
    _
  $region7: #{tpu_custom_call.1} parent=0 // pred_check_branch
    %10 = sbr.rel (0) target = $region9
  $region8: #{tpu_custom_call.1} parent=0 // pred_region
    _
  $region9: #{tpu_custom_call.1} parent=0 // pred_fallthru
    _
  %v11 = vld [vmem:[%s0] sm:$0xff]
  %v12 = vld [vmem:[%s0 + $0x8] sm:$0xff]
  %v13 = vld [vmem:[%s0 + $0x10] sm:$0xff]
  %v14 = vld [vmem:[%s0 + $0x18] sm:$0xff]
  %v15 = vld [vmem:[%s0 + $0x20] sm:$0xff]
  %v16 = vld [vmem:[%s0 + $0x28] sm:$0xff]
  %v17 = vld [vmem:[%s0 + $0x30] sm:$0xff]
  %v18 = vld [vmem:[%s0 + $0x38] sm:$0xff]
  %v19 = vld [vmem:[%s0 + $0x40] sm:$0xff]
  %v20 = vld [vmem:[%s0 + $0x48] sm:$0xff]
  %v21 = vld [vmem:[%s0 + $0x50] sm:$0xff]
  %v22 = vld [vmem:[%s0 + $0x58] sm:$0xff]
  %v23 = vld [vmem:[%s0 + $0x60] sm:$0xff]
  %v24 = vld [vmem:[%s0 + $0x68] sm:$0xff]
  %v25 = vld [vmem:[%s0 + $0x70] sm:$0xff]
  %v26 = vld [vmem:[%s0 + $0x78] sm:$0xff]
  %v27 = vld [vmem:[%s0 + $0x80] sm:$0xff]
  %v28 = vld [vmem:[%s0 + $0x88] sm:$0xff]
  %v29 = vld [vmem:[%s0 + $0x90] sm:$0xff]
  %v30 = vld [vmem:[%s0 + $0x98] sm:$0xff]
  %v31 = vld [vmem:[%s0 + $0xa0] sm:$0xff]
  %v32 = vld [vmem:[%s0 + $0xa8] sm:$0xff]
  %v33 = vld [vmem:[%s0 + $0xb0] sm:$0xff]
  %v34 = vld [vmem:[%s0 + $0xb8] sm:$0xff]
  %v35 = vld [vmem:[%s0 + $0xc0] sm:$0xff]
  %v36 = vld [vmem:[%s0 + $0xc8] sm:$0xff]
  %v37 = vld [vmem:[%s0 + $0xd0] sm:$0xff]
  %v38 = vld [vmem:[%s0 + $0xd8] sm:$0xff]
  %v39 = vld [vmem:[%s0 + $0xe0] sm:$0xff]
  %v40 = vld [vmem:[%s0 + $0xe8] sm:$0xff]
  %v41 = vld [vmem:[%s0 + $0xf0] sm:$0xff]
  %v42 = vld [vmem:[%s0 + $0xf8] sm:$0xff]
  %v43 = vld [vmem:[%s1] sm:$0xff]
  %v44 = vld [vmem:[%s1 + $0x8] sm:$0xff]
  %v45 = vld [vmem:[%s1 + $0x10] sm:$0xff]
  %v46 = vld [vmem:[%s1 + $0x18] sm:$0xff]
  %v47 = vld [vmem:[%s1 + $0x20] sm:$0xff]
  %v48 = vld [vmem:[%s1 + $0x28] sm:$0xff]
  %v49 = vld [vmem:[%s1 + $0x30] sm:$0xff]
  %v50 = vld [vmem:[%s1 + $0x38] sm:$0xff]
  %v51 = vld [vmem:[%s1 + $0x40] sm:$0xff]
  %v52 = vld [vmem:[%s1 + $0x48] sm:$0xff]
  %v53 = vld [vmem:[%s1 + $0x50] sm:$0xff]
  %v54 = vld [vmem:[%s1 + $0x58] sm:$0xff]
  %v55 = vld [vmem:[%s1 + $0x60] sm:$0xff]
  %v56 = vld [vmem:[%s1 + $0x68] sm:$0xff]
  %v57 = vld [vmem:[%s1 + $0x70] sm:$0xff]
  %v58 = vld [vmem:[%s1 + $0x78] sm:$0xff]
  %v59 = vld [vmem:[%s1 + $0x80] sm:$0xff]
  %v60 = vld [vmem:[%s1 + $0x88] sm:$0xff]
  %v61 = vld [vmem:[%s1 + $0x90] sm:$0xff]
  %v62 = vld [vmem:[%s1 + $0x98] sm:$0xff]
  %v63 = vld [vmem:[%s1 + $0xa0] sm:$0xff]
  %v64 = vld [vmem:[%s1 + $0xa8] sm:$0xff]
  %v65 = vld [vmem:[%s1 + $0xb0] sm:$0xff]
  %v66 = vld [vmem:[%s1 + $0xb8] sm:$0xff]
  %v67 = vld [vmem:[%s1 + $0xc0] sm:$0xff]
  %v68 = vld [vmem:[%s1 + $0xc8] sm:$0xff]
  %v69 = vld [vmem:[%s1 + $0xd0] sm:$0xff]
  %v70 = vld [vmem:[%s1 + $0xd8] sm:$0xff]
  %v71 = vld [vmem:[%s1 + $0xe0] sm:$0xff]
  %v72 = vld [vmem:[%s1 + $0xe8] sm:$0xff]
  %v73 = vld [vmem:[%s1 + $0xf0] sm:$0xff]
  %v74 = vld [vmem:[%s1 + $0xf8] sm:$0xff]
  %v75 = vld [vmem:[%s1 + $0x100] sm:$0xff]
  %v76 = vld [vmem:[%s1 + $0x108] sm:$0xff]
  %v77 = vld [vmem:[%s1 + $0x110] sm:$0xff]
  %v78 = vld [vmem:[%s1 + $0x118] sm:$0xff]
  %v79 = vld [vmem:[%s1 + $0x120] sm:$0xff]
  %v80 = vld [vmem:[%s1 + $0x128] sm:$0xff]
  %v81 = vld [vmem:[%s1 + $0x130] sm:$0xff]
  %v82 = vld [vmem:[%s1 + $0x138] sm:$0xff]
  %v83 = vld [vmem:[%s1 + $0x140] sm:$0xff]
  %v84 = vld [vmem:[%s1 + $0x148] sm:$0xff]
  %v85 = vld [vmem:[%s1 + $0x150] sm:$0xff]
  %v86 = vld [vmem:[%s1 + $0x158] sm:$0xff]
  %v87 = vld [vmem:[%s1 + $0x160] sm:$0xff]
  %v88 = vld [vmem:[%s1 + $0x168] sm:$0xff]
  %v89 = vld [vmem:[%s1 + $0x170] sm:$0xff]
  %v90 = vld [vmem:[%s1 + $0x178] sm:$0xff]
  %v91 = vld [vmem:[%s1 + $0x180] sm:$0xff]
  %v92 = vld [vmem:[%s1 + $0x188] sm:$0xff]
  %v93 = vld [vmem:[%s1 + $0x190] sm:$0xff]
  %v94 = vld [vmem:[%s1 + $0x198] sm:$0xff]
  %v95 = vld [vmem:[%s1 + $0x1a0] sm:$0xff]
  %v96 = vld [vmem:[%s1 + $0x1a8] sm:$0xff]
  %v97 = vld [vmem:[%s1 + $0x1b0] sm:$0xff]
  %v98 = vld [vmem:[%s1 + $0x1b8] sm:$0xff]
  %v99 = vld [vmem:[%s1 + $0x1c0] sm:$0xff]
  %v100 = vld [vmem:[%s1 + $0x1c8] sm:$0xff]
  %v101 = vld [vmem:[%s1 + $0x1d0] sm:$0xff]
  %v102 = vld [vmem:[%s1 + $0x1d8] sm:$0xff]
  %v103 = vld [vmem:[%s1 + $0x1e0] sm:$0xff]
  %v104 = vld [vmem:[%s1 + $0x1e8] sm:$0xff]
  %v105 = vld [vmem:[%s1 + $0x1f0] sm:$0xff]
  %v106 = vld [vmem:[%s1 + $0x1f8] sm:$0xff]
  %v107 = vld [vmem:[%s1 + $0x200] sm:$0xff]
  %v108 = vld [vmem:[%s1 + $0x208] sm:$0xff]
  %v109 = vld [vmem:[%s1 + $0x210] sm:$0xff]
  %v110 = vld [vmem:[%s1 + $0x218] sm:$0xff]
  %v111 = vld [vmem:[%s1 + $0x220] sm:$0xff]
  %v112 = vld [vmem:[%s1 + $0x228] sm:$0xff]
  %v113 = vld [vmem:[%s1 + $0x230] sm:$0xff]
  %v114 = vld [vmem:[%s1 + $0x238] sm:$0xff]
  %v115 = vld [vmem:[%s1 + $0x240] sm:$0xff]
  %v116 = vld [vmem:[%s1 + $0x248] sm:$0xff]
  %v117 = vld [vmem:[%s1 + $0x250] sm:$0xff]
  %v118 = vld [vmem:[%s1 + $0x258] sm:$0xff]
  %v119 = vld [vmem:[%s1 + $0x260] sm:$0xff]
  %v120 = vld [vmem:[%s1 + $0x268] sm:$0xff]
  %v121 = vld [vmem:[%s1 + $0x270] sm:$0xff]
  %v122 = vld [vmem:[%s1 + $0x278] sm:$0xff]
  %v123 = vld [vmem:[%s1 + $0x280] sm:$0xff]
  %v124 = vld [vmem:[%s1 + $0x288] sm:$0xff]
  %v125 = vld [vmem:[%s1 + $0x290] sm:$0xff]
  %v126 = vld [vmem:[%s1 + $0x298] sm:$0xff]
  %v127 = vld [vmem:[%s1 + $0x2a0] sm:$0xff]
  %v128 = vld [vmem:[%s1 + $0x2a8] sm:$0xff]
  %v129 = vld [vmem:[%s1 + $0x2b0] sm:$0xff]
  %v130 = vld [vmem:[%s1 + $0x2b8] sm:$0xff]
  %v131 = vld [vmem:[%s1 + $0x2c0] sm:$0xff]
  %v132 = vld [vmem:[%s1 + $0x2c8] sm:$0xff]
  %v133 = vld [vmem:[%s1 + $0x2d0] sm:$0xff]
  %v134 = vld [vmem:[%s1 + $0x2d8] sm:$0xff]
  %v135 = vld [vmem:[%s1 + $0x2e0] sm:$0xff]
  %v136 = vld [vmem:[%s1 + $0x2e8] sm:$0xff]
  %v137 = vld [vmem:[%s1 + $0x2f0] sm:$0xff]
  %v138 = vld [vmem:[%s1 + $0x2f8] sm:$0xff]
  %v139 = vld [vmem:[%s1 + $0x300] sm:$0xff]
  %v140 = vld [vmem:[%s1 + $0x308] sm:$0xff]
  %v141 = vld [vmem:[%s1 + $0x310] sm:$0xff]
  %v142 = vld [vmem:[%s1 + $0x318] sm:$0xff]
  %v143 = vld [vmem:[%s1 + $0x320] sm:$0xff]
  %v144 = vld [vmem:[%s1 + $0x328] sm:$0xff]
  %v145 = vld [vmem:[%s1 + $0x330] sm:$0xff]
  %v146 = vld [vmem:[%s1 + $0x338] sm:$0xff]
  %v147 = vld [vmem:[%s1 + $0x340] sm:$0xff]
  %v148 = vld [vmem:[%s1 + $0x348] sm:$0xff]
  %v149 = vld [vmem:[%s1 + $0x350] sm:$0xff]
  %v150 = vld [vmem:[%s1 + $0x358] sm:$0xff]
  %v151 = vld [vmem:[%s1 + $0x360] sm:$0xff]
  %v152 = vld [vmem:[%s1 + $0x368] sm:$0xff]
  %v153 = vld [vmem:[%s1 + $0x370] sm:$0xff]
  %v154 = vld [vmem:[%s1 + $0x378] sm:$0xff]
  %v155 = vld [vmem:[%s1 + $0x380] sm:$0xff]
  %v156 = vld [vmem:[%s1 + $0x388] sm:$0xff]
  %v157 = vld [vmem:[%s1 + $0x390] sm:$0xff]
  %v158 = vld [vmem:[%s1 + $0x398] sm:$0xff]
  %v159 = vld [vmem:[%s1 + $0x3a0] sm:$0xff]
  %v160 = vld [vmem:[%s1 + $0x3a8] sm:$0xff]
  %v161 = vld [vmem:[%s1 + $0x3b0] sm:$0xff]
  %v162 = vld [vmem:[%s1 + $0x3b8] sm:$0xff]
  %v163 = vld [vmem:[%s1 + $0x3c0] sm:$0xff]
  %v164 = vld [vmem:[%s1 + $0x3c8] sm:$0xff]
  %v165 = vld [vmem:[%s1 + $0x3d0] sm:$0xff]
  %v166 = vld [vmem:[%s1 + $0x3d8] sm:$0xff]
  %v167 = vld [vmem:[%s1 + $0x3e0] sm:$0xff]
  %v168 = vld [vmem:[%s1 + $0x3e8] sm:$0xff]
  %v169 = vld [vmem:[%s1 + $0x3f0] sm:$0xff]
  %v170 = vld [vmem:[%s1 + $0x3f8] sm:$0xff]
  %v171 = vld [vmem:[%s1 + $0x400] sm:$0xff]
  %v172 = vld [vmem:[%s1 + $0x408] sm:$0xff]
  %v173 = vld [vmem:[%s1 + $0x410] sm:$0xff]
  %v174 = vld [vmem:[%s1 + $0x418] sm:$0xff]
  %v175 = vld [vmem:[%s1 + $0x420] sm:$0xff]
  %v176 = vld [vmem:[%s1 + $0x428] sm:$0xff]
  %v177 = vld [vmem:[%s1 + $0x430] sm:$0xff]
  %v178 = vld [vmem:[%s1 + $0x438] sm:$0xff]
  %v179 = vld [vmem:[%s1 + $0x440] sm:$0xff]
  %v180 = vld [vmem:[%s1 + $0x448] sm:$0xff]
  %v181 = vld [vmem:[%s1 + $0x450] sm:$0xff]
  %v182 = vld [vmem:[%s1 + $0x458] sm:$0xff]
  %v183 = vld [vmem:[%s1 + $0x460] sm:$0xff]
  %v184 = vld [vmem:[%s1 + $0x468] sm:$0xff]
  %v185 = vld [vmem:[%s1 + $0x470] sm:$0xff]
  %v186 = vld [vmem:[%s1 + $0x478] sm:$0xff]
  %v187 = vld [vmem:[%s1 + $0x480] sm:$0xff]
  %v188 = vld [vmem:[%s1 + $0x488] sm:$0xff]
  %v189 = vld [vmem:[%s1 + $0x490] sm:$0xff]
  %v190 = vld [vmem:[%s1 + $0x498] sm:$0xff]
  %v191 = vld [vmem:[%s1 + $0x4a0] sm:$0xff]
  %v192 = vld [vmem:[%s1 + $0x4a8] sm:$0xff]
  %v193 = vld [vmem:[%s1 + $0x4b0] sm:$0xff]
  %v194 = vld [vmem:[%s1 + $0x4b8] sm:$0xff]
  %v195 = vld [vmem:[%s1 + $0x4c0] sm:$0xff]
  %v196 = vld [vmem:[%s1 + $0x4c8] sm:$0xff]
  %v197 = vld [vmem:[%s1 + $0x4d0] sm:$0xff]
  %v198 = vld [vmem:[%s1 + $0x4d8] sm:$0xff]
  %v199 = vld [vmem:[%s1 + $0x4e0] sm:$0xff]
  %v200 = vld [vmem:[%s1 + $0x4e8] sm:$0xff]
  %v201 = vld [vmem:[%s1 + $0x4f0] sm:$0xff]
  %v202 = vld [vmem:[%s1 + $0x4f8] sm:$0xff]
  %v203 = vld [vmem:[%s1 + $0x500] sm:$0xff]
  %v204 = vld [vmem:[%s1 + $0x508] sm:$0xff]
  %v205 = vld [vmem:[%s1 + $0x510] sm:$0xff]
  %v206 = vld [vmem:[%s1 + $0x518] sm:$0xff]
  %v207 = vld [vmem:[%s1 + $0x520] sm:$0xff]
  %v208 = vld [vmem:[%s1 + $0x528] sm:$0xff]
  %v209 = vld [vmem:[%s1 + $0x530] sm:$0xff]
  %v210 = vld [vmem:[%s1 + $0x538] sm:$0xff]
  %v211 = vld [vmem:[%s1 + $0x540] sm:$0xff]
  %v212 = vld [vmem:[%s1 + $0x548] sm:$0xff]
  %v213 = vld [vmem:[%s1 + $0x550] sm:$0xff]
  %v214 = vld [vmem:[%s1 + $0x558] sm:$0xff]
  %v215 = vld [vmem:[%s1 + $0x560] sm:$0xff]
  %v216 = vld [vmem:[%s1 + $0x568] sm:$0xff]
  %v217 = vld [vmem:[%s1 + $0x570] sm:$0xff]
  %v218 = vld [vmem:[%s1 + $0x578] sm:$0xff]
  %v219 = vld [vmem:[%s1 + $0x580] sm:$0xff]
  %v220 = vld [vmem:[%s1 + $0x588] sm:$0xff]
  %v221 = vld [vmem:[%s1 + $0x590] sm:$0xff]
  %v222 = vld [vmem:[%s1 + $0x598] sm:$0xff]
  %v223 = vld [vmem:[%s1 + $0x5a0] sm:$0xff]
  %v224 = vld [vmem:[%s1 + $0x5a8] sm:$0xff]
  %v225 = vld [vmem:[%s1 + $0x5b0] sm:$0xff]
  %v226 = vld [vmem:[%s1 + $0x5b8] sm:$0xff]
  %v227 = vld [vmem:[%s1 + $0x5c0] sm:$0xff]
  %v228 = vld [vmem:[%s1 + $0x5c8] sm:$0xff]
  %v229 = vld [vmem:[%s1 + $0x5d0] sm:$0xff]
  %v230 = vld [vmem:[%s1 + $0x5d8] sm:$0xff]
  %v231 = vld [vmem:[%s1 + $0x5e0] sm:$0xff]
  %v232 = vld [vmem:[%s1 + $0x5e8] sm:$0xff]
  %v233 = vld [vmem:[%s1 + $0x5f0] sm:$0xff]
  %v234 = vld [vmem:[%s1 + $0x5f8] sm:$0xff]
  %v235 = vld [vmem:[%s1 + $0x600] sm:$0xff]
  %v236 = vld [vmem:[%s1 + $0x608] sm:$0xff]
  %v237 = vld [vmem:[%s1 + $0x610] sm:$0xff]
  %v238 = vld [vmem:[%s1 + $0x618] sm:$0xff]
  %v239 = vld [vmem:[%s1 + $0x620] sm:$0xff]
  %v240 = vld [vmem:[%s1 + $0x628] sm:$0xff]
  %v241 = vld [vmem:[%s1 + $0x630] sm:$0xff]
  %v242 = vld [vmem:[%s1 + $0x638] sm:$0xff]
  %v243 = vld [vmem:[%s1 + $0x640] sm:$0xff]
  %v244 = vld [vmem:[%s1 + $0x648] sm:$0xff]
  %v245 = vld [vmem:[%s1 + $0x650] sm:$0xff]
  %v246 = vld [vmem:[%s1 + $0x658] sm:$0xff]
  %v247 = vld [vmem:[%s1 + $0x660] sm:$0xff]
  %v248 = vld [vmem:[%s1 + $0x668] sm:$0xff]
  %v249 = vld [vmem:[%s1 + $0x670] sm:$0xff]
  %v250 = vld [vmem:[%s1 + $0x678] sm:$0xff]
  %v251 = vld [vmem:[%s1 + $0x680] sm:$0xff]
  %v252 = vld [vmem:[%s1 + $0x688] sm:$0xff]
  %v253 = vld [vmem:[%s1 + $0x690] sm:$0xff]
  %v254 = vld [vmem:[%s1 + $0x698] sm:$0xff]
  %v255 = vld [vmem:[%s1 + $0x6a0] sm:$0xff]
  %v256 = vld [vmem:[%s1 + $0x6a8] sm:$0xff]
  %v257 = vld [vmem:[%s1 + $0x6b0] sm:$0xff]
  %v258 = vld [vmem:[%s1 + $0x6b8] sm:$0xff]
  %v259 = vld [vmem:[%s1 + $0x6c0] sm:$0xff]
  %v260 = vld [vmem:[%s1 + $0x6c8] sm:$0xff]
  %v261 = vld [vmem:[%s1 + $0x6d0] sm:$0xff]
  %v262 = vld [vmem:[%s1 + $0x6d8] sm:$0xff]
  %v263 = vld [vmem:[%s1 + $0x6e0] sm:$0xff]
  %v264 = vld [vmem:[%s1 + $0x6e8] sm:$0xff]
  %v265 = vld [vmem:[%s1 + $0x6f0] sm:$0xff]
  %v266 = vld [vmem:[%s1 + $0x6f8] sm:$0xff]
  %v267 = vld [vmem:[%s1 + $0x700] sm:$0xff]
  %v268 = vld [vmem:[%s1 + $0x708] sm:$0xff]
  %v269 = vld [vmem:[%s1 + $0x710] sm:$0xff]
  %v270 = vld [vmem:[%s1 + $0x718] sm:$0xff]
  %v271 = vld [vmem:[%s1 + $0x720] sm:$0xff]
  %v272 = vld [vmem:[%s1 + $0x728] sm:$0xff]
  %v273 = vld [vmem:[%s1 + $0x730] sm:$0xff]
  %v274 = vld [vmem:[%s1 + $0x738] sm:$0xff]
  %v275 = vld [vmem:[%s1 + $0x740] sm:$0xff]
  %v276 = vld [vmem:[%s1 + $0x748] sm:$0xff]
  %v277 = vld [vmem:[%s1 + $0x750] sm:$0xff]
  %v278 = vld [vmem:[%s1 + $0x758] sm:$0xff]
  %v279 = vld [vmem:[%s1 + $0x760] sm:$0xff]
  %v280 = vld [vmem:[%s1 + $0x768] sm:$0xff]
  %v281 = vld [vmem:[%s1 + $0x770] sm:$0xff]
  %v282 = vld [vmem:[%s1 + $0x778] sm:$0xff]
  %v283 = vld [vmem:[%s1 + $0x780] sm:$0xff]
  %v284 = vld [vmem:[%s1 + $0x788] sm:$0xff]
  %v285 = vld [vmem:[%s1 + $0x790] sm:$0xff]
  %v286 = vld [vmem:[%s1 + $0x798] sm:$0xff]
  %v287 = vld [vmem:[%s1 + $0x7a0] sm:$0xff]
  %v288 = vld [vmem:[%s1 + $0x7a8] sm:$0xff]
  %v289 = vld [vmem:[%s1 + $0x7b0] sm:$0xff]
  %v290 = vld [vmem:[%s1 + $0x7b8] sm:$0xff]
  %v291 = vld [vmem:[%s1 + $0x7c0] sm:$0xff]
  %v292 = vld [vmem:[%s1 + $0x7c8] sm:$0xff]
  %v293 = vld [vmem:[%s1 + $0x7d0] sm:$0xff]
  %v294 = vld [vmem:[%s1 + $0x7d8] sm:$0xff]
  %v295 = vld [vmem:[%s1 + $0x7e0] sm:$0xff]
  %v296 = vld [vmem:[%s1 + $0x7e8] sm:$0xff]
  %v297 = vld [vmem:[%s1 + $0x7f0] sm:$0xff]
  %v298 = vld [vmem:[%s1 + $0x7f8] sm:$0xff]
  %299 = vmatpush.msra.mxu0 %v58
  %300 = vmatpush.msra.mxu0 %v57
  %301 = vmatpush.msra.mxu0 %v56
  %302 = vmatpush.msra.mxu0 %v55
  %303 = vmatpush.msra.mxu0 %v54
  %304 = vmatpush.msra.mxu0 %v53
  %305 = vmatpush.msra.mxu0 %v52
  %306 = vmatpush.msra.mxu0 %v51
  %307 = vmatpush.msra.mxu0 %v50
  %308 = vmatpush.msra.mxu0 %v49
  %309 = vmatpush.msra.mxu0 %v48
  %310 = vmatpush.msra.mxu0 %v47
  %311 = vmatpush.msra.mxu0 %v46
  %312 = vmatpush.msra.mxu0 %v45
  %313 = vmatpush.msra.mxu0 %v44
  %314 = vmatpush.msra.mxu0 %v43
  %315 = vmatmul.f32.gmra.mxu0 %v11
  %v316 = vpop.f32.mrf.mxu0
  %v317 = vadd.f32 0.0, %v316
  %318 = vmatmul.f32.gmra.mxu0 %v27
  %v319 = vpop.f32.mrf.mxu0
  %v320 = vadd.f32 0.0, %v319
  %321 = vdwg.mxu0
  %322 = vmatpush.msra.mxu0 %v74
  %323 = vmatpush.msra.mxu0 %v73
  %324 = vmatpush.msra.mxu0 %v72
  %325 = vmatpush.msra.mxu0 %v71
  %326 = vmatpush.msra.mxu0 %v70
  %327 = vmatpush.msra.mxu0 %v69
  %328 = vmatpush.msra.mxu0 %v68
  %329 = vmatpush.msra.mxu0 %v67
  %330 = vmatpush.msra.mxu0 %v66
  %331 = vmatpush.msra.mxu0 %v65
  %332 = vmatpush.msra.mxu0 %v64
  %333 = vmatpush.msra.mxu0 %v63
  %334 = vmatpush.msra.mxu0 %v62
  %335 = vmatpush.msra.mxu0 %v61
  %336 = vmatpush.msra.mxu0 %v60
  %337 = vmatpush.msra.mxu0 %v59
  %338 = vmatmul.f32.gmra.mxu0 %v12
  %v339 = vpop.f32.mrf.mxu0
  %v340 = vadd.f32 %v317, %v339
  %341 = vmatmul.f32.gmra.mxu0 %v28
  %v342 = vpop.f32.mrf.mxu0
  %v343 = vadd.f32 %v320, %v342
  %344 = vdwg.mxu0
  %345 = vmatpush.msra.mxu0 %v90
  %346 = vmatpush.msra.mxu0 %v89
  %347 = vmatpush.msra.mxu0 %v88
  %348 = vmatpush.msra.mxu0 %v87
  %349 = vmatpush.msra.mxu0 %v86
  %350 = vmatpush.msra.mxu0 %v85
  %351 = vmatpush.msra.mxu0 %v84
  %352 = vmatpush.msra.mxu0 %v83
  %353 = vmatpush.msra.mxu0 %v82
  %354 = vmatpush.msra.mxu0 %v81
  %355 = vmatpush.msra.mxu0 %v80
  %356 = vmatpush.msra.mxu0 %v79
  %357 = vmatpush.msra.mxu0 %v78
  %358 = vmatpush.msra.mxu0 %v77
  %359 = vmatpush.msra.mxu0 %v76
  %360 = vmatpush.msra.mxu0 %v75
  %361 = vmatmul.f32.gmra.mxu0 %v13
  %v362 = vpop.f32.mrf.mxu0
  %v363 = vadd.f32 %v340, %v362
  %364 = vmatmul.f32.gmra.mxu0 %v29
  %v365 = vpop.f32.mrf.mxu0
  %v366 = vadd.f32 %v343, %v365
  %367 = vdwg.mxu0
  %368 = vmatpush.msra.mxu0 %v106
  %369 = vmatpush.msra.mxu0 %v105
  %370 = vmatpush.msra.mxu0 %v104
  %371 = vmatpush.msra.mxu0 %v103
  %372 = vmatpush.msra.mxu0 %v102
  %373 = vmatpush.msra.mxu0 %v101
  %374 = vmatpush.msra.mxu0 %v100
  %375 = vmatpush.msra.mxu0 %v99
  %376 = vmatpush.msra.mxu0 %v98
  %377 = vmatpush.msra.mxu0 %v97
  %378 = vmatpush.msra.mxu0 %v96
  %379 = vmatpush.msra.mxu0 %v95
  %380 = vmatpush.msra.mxu0 %v94
  %381 = vmatpush.msra.mxu0 %v93
  %382 = vmatpush.msra.mxu0 %v92
  %383 = vmatpush.msra.mxu0 %v91
  %384 = vmatmul.f32.gmra.mxu0 %v14
  %v385 = vpop.f32.mrf.mxu0
  %v386 = vadd.f32 %v363, %v385
  %387 = vmatmul.f32.gmra.mxu0 %v30
  %v388 = vpop.f32.mrf.mxu0
  %v389 = vadd.f32 %v366, %v388
  %390 = vdwg.mxu0
  %391 = vmatpush.msra.mxu0 %v122
  %392 = vmatpush.msra.mxu0 %v121
  %393 = vmatpush.msra.mxu0 %v120
  %394 = vmatpush.msra.mxu0 %v119
  %395 = vmatpush.msra.mxu0 %v118
  %396 = vmatpush.msra.mxu0 %v117
  %397 = vmatpush.msra.mxu0 %v116
  %398 = vmatpush.msra.mxu0 %v115
  %399 = vmatpush.msra.mxu0 %v114
  %400 = vmatpush.msra.mxu0 %v113
  %401 = vmatpush.msra.mxu0 %v112
  %402 = vmatpush.msra.mxu0 %v111
  %403 = vmatpush.msra.mxu0 %v110
  %404 = vmatpush.msra.mxu0 %v109
  %405 = vmatpush.msra.mxu0 %v108
  %406 = vmatpush.msra.mxu0 %v107
  %407 = vmatmul.f32.gmra.mxu0 %v15
  %v408 = vpop.f32.mrf.mxu0
  %v409 = vadd.f32 %v386, %v408
  %410 = vmatmul.f32.gmra.mxu0 %v31
  %v411 = vpop.f32.mrf.mxu0
  %v412 = vadd.f32 %v389, %v411
  %413 = vdwg.mxu0
  %414 = vmatpush.msra.mxu0 %v138
  %415 = vmatpush.msra.mxu0 %v137
  %416 = vmatpush.msra.mxu0 %v136
  %417 = vmatpush.msra.mxu0 %v135
  %418 = vmatpush.msra.mxu0 %v134
  %419 = vmatpush.msra.mxu0 %v133
  %420 = vmatpush.msra.mxu0 %v132
  %421 = vmatpush.msra.mxu0 %v131
  %422 = vmatpush.msra.mxu0 %v130
  %423 = vmatpush.msra.mxu0 %v129
  %424 = vmatpush.msra.mxu0 %v128
  %425 = vmatpush.msra.mxu0 %v127
  %426 = vmatpush.msra.mxu0 %v126
  %427 = vmatpush.msra.mxu0 %v125
  %428 = vmatpush.msra.mxu0 %v124
  %429 = vmatpush.msra.mxu0 %v123
  %430 = vmatmul.f32.gmra.mxu0 %v16
  %v431 = vpop.f32.mrf.mxu0
  %v432 = vadd.f32 %v409, %v431
  %433 = vmatmul.f32.gmra.mxu0 %v32
  %v434 = vpop.f32.mrf.mxu0
  %v435 = vadd.f32 %v412, %v434
  %436 = vdwg.mxu0
  %437 = vmatpush.msra.mxu0 %v154
  %438 = vmatpush.msra.mxu0 %v153
  %439 = vmatpush.msra.mxu0 %v152
  %440 = vmatpush.msra.mxu0 %v151
  %441 = vmatpush.msra.mxu0 %v150
  %442 = vmatpush.msra.mxu0 %v149
  %443 = vmatpush.msra.mxu0 %v148
  %444 = vmatpush.msra.mxu0 %v147
  %445 = vmatpush.msra.mxu0 %v146
  %446 = vmatpush.msra.mxu0 %v145
  %447 = vmatpush.msra.mxu0 %v144
  %448 = vmatpush.msra.mxu0 %v143
  %449 = vmatpush.msra.mxu0 %v142
  %450 = vmatpush.msra.mxu0 %v141
  %451 = vmatpush.msra.mxu0 %v140
  %452 = vmatpush.msra.mxu0 %v139
  %453 = vmatmul.f32.gmra.mxu0 %v17
  %v454 = vpop.f32.mrf.mxu0
  %v455 = vadd.f32 %v432, %v454
  %456 = vmatmul.f32.gmra.mxu0 %v33
  %v457 = vpop.f32.mrf.mxu0
  %v458 = vadd.f32 %v435, %v457
  %459 = vdwg.mxu0
  %460 = vmatpush.msra.mxu0 %v170
  %461 = vmatpush.msra.mxu0 %v169
  %462 = vmatpush.msra.mxu0 %v168
  %463 = vmatpush.msra.mxu0 %v167
  %464 = vmatpush.msra.mxu0 %v166
  %465 = vmatpush.msra.mxu0 %v165
  %466 = vmatpush.msra.mxu0 %v164
  %467 = vmatpush.msra.mxu0 %v163
  %468 = vmatpush.msra.mxu0 %v162
  %469 = vmatpush.msra.mxu0 %v161
  %470 = vmatpush.msra.mxu0 %v160
  %471 = vmatpush.msra.mxu0 %v159
  %472 = vmatpush.msra.mxu0 %v158
  %473 = vmatpush.msra.mxu0 %v157
  %474 = vmatpush.msra.mxu0 %v156
  %475 = vmatpush.msra.mxu0 %v155
  %476 = vmatmul.f32.gmra.mxu0 %v18
  %v477 = vpop.f32.mrf.mxu0
  %v478 = vadd.f32 %v455, %v477
  %479 = vmatmul.f32.gmra.mxu0 %v34
  %v480 = vpop.f32.mrf.mxu0
  %v481 = vadd.f32 %v458, %v480
  %482 = vdwg.mxu0
  %483 = vmatpush.msra.mxu0 %v186
  %484 = vmatpush.msra.mxu0 %v185
  %485 = vmatpush.msra.mxu0 %v184
  %486 = vmatpush.msra.mxu0 %v183
  %487 = vmatpush.msra.mxu0 %v182
  %488 = vmatpush.msra.mxu0 %v181
  %489 = vmatpush.msra.mxu0 %v180
  %490 = vmatpush.msra.mxu0 %v179
  %491 = vmatpush.msra.mxu0 %v178
  %492 = vmatpush.msra.mxu0 %v177
  %493 = vmatpush.msra.mxu0 %v176
  %494 = vmatpush.msra.mxu0 %v175
  %495 = vmatpush.msra.mxu0 %v174
  %496 = vmatpush.msra.mxu0 %v173
  %497 = vmatpush.msra.mxu0 %v172
  %498 = vmatpush.msra.mxu0 %v171
  %499 = vmatmul.f32.gmra.mxu0 %v19
  %v500 = vpop.f32.mrf.mxu0
  %v501 = vadd.f32 %v478, %v500
  %502 = vmatmul.f32.gmra.mxu0 %v35
  %v503 = vpop.f32.mrf.mxu0
  %v504 = vadd.f32 %v481, %v503
  %505 = vdwg.mxu0
  %506 = vmatpush.msra.mxu0 %v202
  %507 = vmatpush.msra.mxu0 %v201
  %508 = vmatpush.msra.mxu0 %v200
  %509 = vmatpush.msra.mxu0 %v199
  %510 = vmatpush.msra.mxu0 %v198
  %511 = vmatpush.msra.mxu0 %v197
  %512 = vmatpush.msra.mxu0 %v196
  %513 = vmatpush.msra.mxu0 %v195
  %514 = vmatpush.msra.mxu0 %v194
  %515 = vmatpush.msra.mxu0 %v193
  %516 = vmatpush.msra.mxu0 %v192
  %517 = vmatpush.msra.mxu0 %v191
  %518 = vmatpush.msra.mxu0 %v190
  %519 = vmatpush.msra.mxu0 %v189
  %520 = vmatpush.msra.mxu0 %v188
  %521 = vmatpush.msra.mxu0 %v187
  %522 = vmatmul.f32.gmra.mxu0 %v20
  %v523 = vpop.f32.mrf.mxu0
  %v524 = vadd.f32 %v501, %v523
  %525 = vmatmul.f32.gmra.mxu0 %v36
  %v526 = vpop.f32.mrf.mxu0
  %v527 = vadd.f32 %v504, %v526
  %528 = vdwg.mxu0
  %529 = vmatpush.msra.mxu0 %v218
  %530 = vmatpush.msra.mxu0 %v217
  %531 = vmatpush.msra.mxu0 %v216
  %532 = vmatpush.msra.mxu0 %v215
  %533 = vmatpush.msra.mxu0 %v214
  %534 = vmatpush.msra.mxu0 %v213
  %535 = vmatpush.msra.mxu0 %v212
  %536 = vmatpush.msra.mxu0 %v211
  %537 = vmatpush.msra.mxu0 %v210
  %538 = vmatpush.msra.mxu0 %v209
  %539 = vmatpush.msra.mxu0 %v208
  %540 = vmatpush.msra.mxu0 %v207
  %541 = vmatpush.msra.mxu0 %v206
  %542 = vmatpush.msra.mxu0 %v205
  %543 = vmatpush.msra.mxu0 %v204
  %544 = vmatpush.msra.mxu0 %v203
  %545 = vmatmul.f32.gmra.mxu0 %v21
  %v546 = vpop.f32.mrf.mxu0
  %v547 = vadd.f32 %v524, %v546
  %548 = vmatmul.f32.gmra.mxu0 %v37
  %v549 = vpop.f32.mrf.mxu0
  %v550 = vadd.f32 %v527, %v549
  %551 = vdwg.mxu0
  %552 = vmatpush.msra.mxu0 %v234
  %553 = vmatpush.msra.mxu0 %v233
  %554 = vmatpush.msra.mxu0 %v232
  %555 = vmatpush.msra.mxu0 %v231
  %556 = vmatpush.msra.mxu0 %v230
  %557 = vmatpush.msra.mxu0 %v229
  %558 = vmatpush.msra.mxu0 %v228
  %559 = vmatpush.msra.mxu0 %v227
  %560 = vmatpush.msra.mxu0 %v226
  %561 = vmatpush.msra.mxu0 %v225
  %562 = vmatpush.msra.mxu0 %v224
  %563 = vmatpush.msra.mxu0 %v223
  %564 = vmatpush.msra.mxu0 %v222
  %565 = vmatpush.msra.mxu0 %v221
  %566 = vmatpush.msra.mxu0 %v220
  %567 = vmatpush.msra.mxu0 %v219
  %568 = vmatmul.f32.gmra.mxu0 %v22
  %v569 = vpop.f32.mrf.mxu0
  %v570 = vadd.f32 %v547, %v569
  %571 = vmatmul.f32.gmra.mxu0 %v38
  %v572 = vpop.f32.mrf.mxu0
  %v573 = vadd.f32 %v550, %v572
  %574 = vdwg.mxu0
  %575 = vmatpush.msra.mxu0 %v250
  %576 = vmatpush.msra.mxu0 %v249
  %577 = vmatpush.msra.mxu0 %v248
  %578 = vmatpush.msra.mxu0 %v247
  %579 = vmatpush.msra.mxu0 %v246
  %580 = vmatpush.msra.mxu0 %v245
  %581 = vmatpush.msra.mxu0 %v244
  %582 = vmatpush.msra.mxu0 %v243
  %583 = vmatpush.msra.mxu0 %v242
  %584 = vmatpush.msra.mxu0 %v241
  %585 = vmatpush.msra.mxu0 %v240
  %586 = vmatpush.msra.mxu0 %v239
  %587 = vmatpush.msra.mxu0 %v238
  %588 = vmatpush.msra.mxu0 %v237
  %589 = vmatpush.msra.mxu0 %v236
  %590 = vmatpush.msra.mxu0 %v235
  %591 = vmatmul.f32.gmra.mxu0 %v23
  %v592 = vpop.f32.mrf.mxu0
  %v593 = vadd.f32 %v570, %v592
  %594 = vmatmul.f32.gmra.mxu0 %v39
  %v595 = vpop.f32.mrf.mxu0
  %v596 = vadd.f32 %v573, %v595
  %597 = vdwg.mxu0
  %598 = vmatpush.msra.mxu0 %v266
  %599 = vmatpush.msra.mxu0 %v265
  %600 = vmatpush.msra.mxu0 %v264
  %601 = vmatpush.msra.mxu0 %v263
  %602 = vmatpush.msra.mxu0 %v262
  %603 = vmatpush.msra.mxu0 %v261
  %604 = vmatpush.msra.mxu0 %v260
  %605 = vmatpush.msra.mxu0 %v259
  %606 = vmatpush.msra.mxu0 %v258
  %607 = vmatpush.msra.mxu0 %v257
  %608 = vmatpush.msra.mxu0 %v256
  %609 = vmatpush.msra.mxu0 %v255
  %610 = vmatpush.msra.mxu0 %v254
  %611 = vmatpush.msra.mxu0 %v253
  %612 = vmatpush.msra.mxu0 %v252
  %613 = vmatpush.msra.mxu0 %v251
  %614 = vmatmul.f32.gmra.mxu0 %v24
  %v615 = vpop.f32.mrf.mxu0
  %v616 = vadd.f32 %v593, %v615
  %617 = vmatmul.f32.gmra.mxu0 %v40
  %v618 = vpop.f32.mrf.mxu0
  %v619 = vadd.f32 %v596, %v618
  %620 = vdwg.mxu0
  %621 = vmatpush.msra.mxu0 %v282
  %622 = vmatpush.msra.mxu0 %v281
  %623 = vmatpush.msra.mxu0 %v280
  %624 = vmatpush.msra.mxu0 %v279
  %625 = vmatpush.msra.mxu0 %v278
  %626 = vmatpush.msra.mxu0 %v277
  %627 = vmatpush.msra.mxu0 %v276
  %628 = vmatpush.msra.mxu0 %v275
  %629 = vmatpush.msra.mxu0 %v274
  %630 = vmatpush.msra.mxu0 %v273
  %631 = vmatpush.msra.mxu0 %v272
  %632 = vmatpush.msra.mxu0 %v271
  %633 = vmatpush.msra.mxu0 %v270
  %634 = vmatpush.msra.mxu0 %v269
  %635 = vmatpush.msra.mxu0 %v268
  %636 = vmatpush.msra.mxu0 %v267
  %637 = vmatmul.f32.gmra.mxu0 %v25
  %v638 = vpop.f32.mrf.mxu0
  %v639 = vadd.f32 %v616, %v638
  %640 = vmatmul.f32.gmra.mxu0 %v41
  %v641 = vpop.f32.mrf.mxu0
  %v642 = vadd.f32 %v619, %v641
  %643 = vdwg.mxu0
  %644 = vmatpush.msra.mxu0 %v298
  %645 = vmatpush.msra.mxu0 %v297
  %646 = vmatpush.msra.mxu0 %v296
  %647 = vmatpush.msra.mxu0 %v295
  %648 = vmatpush.msra.mxu0 %v294
  %649 = vmatpush.msra.mxu0 %v293
  %650 = vmatpush.msra.mxu0 %v292
  %651 = vmatpush.msra.mxu0 %v291
  %652 = vmatpush.msra.mxu0 %v290
  %653 = vmatpush.msra.mxu0 %v289
  %654 = vmatpush.msra.mxu0 %v288
  %655 = vmatpush.msra.mxu0 %v287
  %656 = vmatpush.msra.mxu0 %v286
  %657 = vmatpush.msra.mxu0 %v285
  %658 = vmatpush.msra.mxu0 %v284
  %659 = vmatpush.msra.mxu0 %v283
  %660 = vmatmul.f32.gmra.mxu0 %v26
  %v661 = vpop.f32.mrf.mxu0
  %v662 = vadd.f32 %v639, %v661
  %663 = vmatmul.f32.gmra.mxu0 %v42
  %v664 = vpop.f32.mrf.mxu0
  %v665 = vadd.f32 %v642, %v664
  %666 = vdwg.mxu0
  %vm667 = vcmask 31744
  %668 = vst.msk [vmem:[%s2] sm:$0xff] %vm667, %v662
  %669 = vst.msk [vmem:[%s2 + $0x8] sm:$0xff] %vm667, %v665
  // Predicated region
  $region10: #{tpu_custom_call.1} parent=0 // pred_check
    _
  $region11: #{tpu_custom_call.1} parent=0 // pred_check_branch
    %671 = sbr.rel (0) target = $region13
  $region12: #{tpu_custom_call.1} parent=0 // pred_region
    _
  $region13: #{tpu_custom_call.1} parent=0 // pred_fallthru
    _
  // Predicated region
  $region14: #{tpu_custom_call.1} parent=0 // pred_check
    _
  $region15: #{tpu_custom_call.1} parent=0 // pred_check_branch
    %673 = sbr.rel (0) target = $region17
  $region16: #{tpu_custom_call.1} parent=0 // pred_region
    _
  $region17: #{tpu_custom_call.1} parent=0 // pred_fallthru
    _

</llo_original>
